<compile_context>
chip_gen: v7x
topology: tpu7x:2x2x1
jax: 0.10.0
libtpu: 0.0.40
codegen_flags: <defaults>
</compile_context>

<pallas_src>
import jax
import jax.numpy as jnp
from jax.experimental import pallas as pl
from jax.experimental.pallas import tpu as pltpu

BN_EPS = 1e-5

H1, H2, H3 = 256, 128, 64      # hidden widths of the MLP
H3_PAD = 128                   # layer-3 width padded to a full lane group
OUT_PAD = 128                  # lane-dense padded output width (>= num_classes)
MAX_TILE_B = 512               # cap on the batch tile (rows per grid step)


def voice_classifier_kernel(x_ref, w1_ref, w2_ref, w3_ref, w4_ref, bias_ref, out_ref):
    """Fused forward for one (TILE_B, input_size) batch tile.

    Weights w1..w4 are bf16 (BN already folded, layer-3/head padded to 128 lanes).
    bias_ref is a packed (4, H1) f32 array:
      row 0: b1 (H1 wide)  row 1: b2' (H2 wide)  row 2: b3' (H3_PAD wide)  row 3: b4' (OUT_PAD wide)
    """
    x = x_ref[...].astype(jnp.bfloat16)

    # Block 1: Linear(input_size, 256) -> ReLU   (BN1 folded into layer 2, Dropout = identity)
    h = jnp.dot(x, w1_ref[...], preferred_element_type=jnp.float32) + bias_ref[0:1, :H1]
    h = jnp.maximum(h, 0.0)

    # Block 2: Linear(256, 128) -> ReLU          (BN2 folded into layer 3)
    h = jnp.dot(h.astype(jnp.bfloat16), w2_ref[...],
                preferred_element_type=jnp.float32) + bias_ref[1:2, :H2]
    h = jnp.maximum(h, 0.0)

    # Block 3: Linear(128, 64->128 padded) -> ReLU   (BN3 folded into the head)
    h = jnp.dot(h.astype(jnp.bfloat16), w3_ref[...],
                preferred_element_type=jnp.float32) + bias_ref[2:3, :H3_PAD]
    h = jnp.maximum(h, 0.0)

    # Head: Linear(64->128 padded, num_classes) padded to OUT_PAD lanes (lane-dense store).
    logits = jnp.dot(h.astype(jnp.bfloat16), w4_ref[...],
                     preferred_element_type=jnp.float32) + bias_ref[3:4, :OUT_PAD]
    out_ref[...] = logits.astype(out_ref.dtype)   # bf16 writeback (half the HBM bytes)


def _choose_tile_b(batch):
    """Pick a batch tile: large (amortize per-step overhead), 16-aligned (bf16 output),
    and giving >=2 grid steps when possible (v7x megacore)."""
    if batch > MAX_TILE_B:
        return MAX_TILE_B
    half = -(-batch // 2)                 # ceil(batch/2)
    half16 = ((half + 15) // 16) * 16     # round up to a multiple of 16
    if half16 < batch:
        return half16                     # >=2 aligned tiles
    return batch                          # single tile covering the whole batch (full-dim block)


def init_params(key, input_size, num_classes):
    """Deterministic synthetic parameters matching VoiceClassifier's shapes (eval mode)."""
    dims = [(input_size, H1), (H1, H2), (H2, H3), (H3, num_classes)]
    params = []
    for i, (d_in, d_out) in enumerate(dims):
        key, kw, kb = jax.random.split(key, 3)
        # (in, out) layout == transpose of PyTorch's (out, in) weight.
        w = jax.random.normal(kw, (d_in, d_out), jnp.float32) * (1.0 / jnp.sqrt(d_in))
        b = jax.random.normal(kb, (1, d_out), jnp.float32) * 0.01
        params.extend([w, b])
        if i < 3:  # BatchNorm1d after the first three Linear+ReLU blocks
            key, kg, kbe, km, kv = jax.random.split(key, 5)
            gamma = 1.0 + 0.1 * jax.random.normal(kg, (1, d_out), jnp.float32)
            beta = 0.1 * jax.random.normal(kbe, (1, d_out), jnp.float32)
            mean = 0.1 * jax.random.normal(km, (1, d_out), jnp.float32)
            var = 1.0 + 0.1 * jax.random.uniform(kv, (1, d_out), jnp.float32)
            params.extend([gamma, beta, mean, var])
    return params


@jax.jit
def voice_classifier_forward(x, params):
    (w1, b1, g1, be1, m1, v1,
     w2, b2, g2, be2, m2, v2,
     w3, b3, g3, be3, m3, v3,
     w4, b4) = params
    input_size = w1.shape[0]
    num_classes = w4.shape[1]
    assert num_classes <= OUT_PAD and OUT_PAD <= H1 and H2 <= H1 and H3_PAD <= H1

    # ---- Host-side prep: fold eval-mode BN into the following Linear. ----
    def bn_scale_shift(g, be, m, v):
        scale = g * jax.lax.rsqrt(v + BN_EPS)        # (1, C)
        shift = be - m * scale                       # (1, C)
        return scale, shift

    s1, t1 = bn_scale_shift(g1, be1, m1, v1)
    s2, t2 = bn_scale_shift(g2, be2, m2, v2)
    s3, t3 = bn_scale_shift(g3, be3, m3, v3)

    w2f = w2 * s1.reshape(-1, 1)
    b2f = b2 + t1 @ w2
    w3f = w3 * s2.reshape(-1, 1)
    b3f = b3 + t2 @ w3
    w4f = w4 * s3.reshape(-1, 1)
    b4f = b4 + t3 @ w4

    # Pad layer 3 to H3_PAD lanes and the head to an OUT_PAD-wide lane-dense output.
    w3p = jnp.zeros((H2, H3_PAD), jnp.float32).at[:, :H3].set(w3f)
    b3p = jnp.zeros((1, H3_PAD), jnp.float32).at[:, :H3].set(b3f)
    w4p = jnp.zeros((H3_PAD, OUT_PAD), jnp.float32).at[:H3, :num_classes].set(w4f)
    b4p = jnp.zeros((1, OUT_PAD), jnp.float32).at[:, :num_classes].set(b4f)

    # bf16 MXU operands (accumulation stays f32 inside the kernel).
    w1_lo = w1.astype(jnp.bfloat16)
    w2_lo = w2f.astype(jnp.bfloat16)
    w3_lo = w3p.astype(jnp.bfloat16)
    w4_lo = w4p.astype(jnp.bfloat16)

    # Pack the four bias rows into a single small (4, H1) f32 array -> one tiny DMA.
    bias_pack = jnp.zeros((4, H1), jnp.float32)
    bias_pack = bias_pack.at[0, :H1].set(b1[0])
    bias_pack = bias_pack.at[1, :H2].set(b2f[0])
    bias_pack = bias_pack.at[2, :H3_PAD].set(b3p[0])
    bias_pack = bias_pack.at[3, :OUT_PAD].set(b4p[0])

    # ---- Batch tiling: no host-side pad; ragged tail block is masked by Pallas. ----
    batch = x.shape[0]
    tile_b = _choose_tile_b(batch)
    num_tiles = pl.cdiv(batch, tile_b)

    flops = 2 * batch * (input_size * H1 + H1 * H2 + H2 * H3_PAD + H3_PAD * OUT_PAD)
    weight_bytes = 2 * (input_size * H1 + H1 * H2 + H2 * H3_PAD + H3_PAD * OUT_PAD) + 4 * 4 * H1
    bytes_accessed = batch * (input_size * 4 + OUT_PAD * 2) + weight_bytes

    out = pl.pallas_call(
        voice_classifier_kernel,
        out_shape=jax.ShapeDtypeStruct((batch, OUT_PAD), jnp.bfloat16),
        grid=(num_tiles,),
        in_specs=[
            pl.BlockSpec((tile_b, input_size), lambda i: (i, 0)),   # x tile
            pl.BlockSpec((input_size, H1), lambda i: (0, 0)),       # w1 (VMEM-resident)
            pl.BlockSpec((H1, H2), lambda i: (0, 0)),               # w2 folded
            pl.BlockSpec((H2, H3_PAD), lambda i: (0, 0)),           # w3 folded + padded
            pl.BlockSpec((H3_PAD, OUT_PAD), lambda i: (0, 0)),      # w4 folded + padded
            pl.BlockSpec((4, H1), lambda i: (0, 0)),                # packed biases (f32)
        ],
        out_specs=pl.BlockSpec((tile_b, OUT_PAD), lambda i: (i, 0)),
        compiler_params=pltpu.CompilerParams(
            dimension_semantics=("parallel",)),                     # 2x on v7x megacore
        cost_estimate=pl.CostEstimate(
            flops=flops, transcendentals=0, bytes_accessed=bytes_accessed),
    )(x, w1_lo, w2_lo, w3_lo, w4_lo, bias_pack)

    return out[:, :num_classes].astype(jnp.float32)


def reference_forward(x, params):
    """Pure-JAX f32 reference (unfolded eval-mode BN) for correctness checking."""
    (w1, b1, g1, be1, m1, v1,
     w2, b2, g2, be2, m2, v2,
     w3, b3, g3, be3, m3, v3,
     w4, b4) = params

    def bn(h, g, be, m, v):
        return (h - m) * (g * jax.lax.rsqrt(v + BN_EPS)) + be

    h = jnp.maximum(x @ w1 + b1, 0.0)
    h = bn(h, g1, be1, m1, v1)
    h = jnp.maximum(h @ w2 + b2, 0.0)
    h = bn(h, g2, be2, m2, v2)
    h = jnp.maximum(h @ w3 + b3, 0.0)
    h = bn(h, g3, be3, m3, v3)
    return h @ w4 + b4


if __name__ == "__main__":
    INPUT_SIZE = 32   # e.g. number of MFCC features
    NUM_CLASSES = 8
    BATCH = 8

    key = jax.random.PRNGKey(0)
    key_x, key_p = jax.random.split(key)
    x = jax.random.normal(key_x, (BATCH, INPUT_SIZE), jnp.float32)
    params = init_params(key_p, INPUT_SIZE, NUM_CLASSES)

    out = voice_classifier_forward(x, params)
    out = jax.block_until_ready(out)

    ref = reference_forward(x, params)
    assert out.shape == (BATCH, NUM_CLASSES)
    # Tolerance loosened vs v1: bf16 MXU operands + bf16 output store (f32 accumulation).
    assert jnp.allclose(out, ref, atol=1e-1, rtol=1e-1), "Pallas output mismatch vs reference"

    print("KERNEL_OK")
</pallas_src>

<mosaic_0001>
module attributes {stable_mosaic.version = 11 : i64} {
  func.func @voice_classifier_kernel(%arg0: i32, %arg1: memref<8x32xf32, #tpu.memory_space<vmem>>, %arg2: memref<32x256xbf16, #tpu.memory_space<vmem>>, %arg3: memref<256x128xbf16, #tpu.memory_space<vmem>>, %arg4: memref<128x128xbf16, #tpu.memory_space<vmem>>, %arg5: memref<128x128xbf16, #tpu.memory_space<vmem>>, %arg6: memref<4x256xf32, #tpu.memory_space<vmem>>, %arg7: memref<8x128xbf16, #tpu.memory_space<vmem>>) attributes {dimension_semantics = [#tpu.dimension_semantics<parallel>], iteration_bounds = array<i64: 1>, scalar_prefetch = 0 : i64, scratch_operands = 0 : i64, tpu.core_type = #tpu.core_type<tc>, window_params = [{transform_indices = @transform_0, window_bounds = array<i64: 8, 32>}, {pipeline_mode = #tpu.pipeline_mode<synchronous>, transform_indices = @transform_1, window_bounds = array<i64: 32, 256>}, {pipeline_mode = #tpu.pipeline_mode<synchronous>, transform_indices = @transform_2, window_bounds = array<i64: 256, 128>}, {pipeline_mode = #tpu.pipeline_mode<synchronous>, transform_indices = @transform_3, window_bounds = array<i64: 128, 128>}, {pipeline_mode = #tpu.pipeline_mode<synchronous>, transform_indices = @transform_4, window_bounds = array<i64: 128, 128>}, {pipeline_mode = #tpu.pipeline_mode<synchronous>, transform_indices = @transform_5, window_bounds = array<i64: 4, 256>}, {transform_indices = @transform_6, window_bounds = array<i64: 8, 128>}]} {
    %c0 = arith.constant 0 : index
    %c0_0 = arith.constant 0 : index
    %0 = vector.load %arg1[%c0, %c0_0] : memref<8x32xf32, #tpu.memory_space<vmem>>, vector<8x32xf32>
    %1 = arith.truncf %0 : vector<8x32xf32> to vector<8x32xbf16>
    %c0_1 = arith.constant 0 : index
    %c0_2 = arith.constant 0 : index
    %2 = vector.load %arg2[%c0_1, %c0_2] : memref<32x256xbf16, #tpu.memory_space<vmem>>, vector<32x256xbf16>
    %cst = arith.constant dense<0.000000e+00> : vector<8x256xf32>
    %3 = tpu.matmul %1, %2, %cst {dimension_numbers = #tpu.dot_dimension_numbers<[1], [0], [0], [1], [0, 0, 1, 1], [], []>} : vector<8x32xbf16>, vector<32x256xbf16>, vector<8x256xf32> -> vector<8x256xf32>
    %c0_3 = arith.constant 0 : index
    %c0_4 = arith.constant 0 : index
    %4 = vector.load %arg6[%c0_3, %c0_4] : memref<4x256xf32, #tpu.memory_space<vmem>>, vector<1x256xf32>
    %5 = vector.broadcast %4 : vector<1x256xf32> to vector<8x256xf32>
    %6 = arith.addf %3, %5 : vector<8x256xf32>
    %cst_5 = arith.constant 0.000000e+00 : f32
    %7 = vector.broadcast %cst_5 : f32 to vector<8x256xf32>
    %8 = arith.maximumf %6, %7 : vector<8x256xf32>
    %9 = arith.truncf %8 : vector<8x256xf32> to vector<8x256xbf16>
    %c0_6 = arith.constant 0 : index
    %c0_7 = arith.constant 0 : index
    %10 = vector.load %arg3[%c0_6, %c0_7] : memref<256x128xbf16, #tpu.memory_space<vmem>>, vector<256x128xbf16>
    %cst_8 = arith.constant dense<0.000000e+00> : vector<8x128xf32>
    %11 = tpu.matmul %9, %10, %cst_8 {dimension_numbers = #tpu.dot_dimension_numbers<[1], [0], [0], [1], [0, 0, 1, 1], [], []>} : vector<8x256xbf16>, vector<256x128xbf16>, vector<8x128xf32> -> vector<8x128xf32>
    %c1 = arith.constant 1 : index
    %c0_9 = arith.constant 0 : index
    %12 = vector.load %arg6[%c1, %c0_9] : memref<4x256xf32, #tpu.memory_space<vmem>>, vector<1x128xf32>
    %13 = vector.broadcast %12 : vector<1x128xf32> to vector<8x128xf32>
    %14 = arith.addf %11, %13 : vector<8x128xf32>
    %cst_10 = arith.constant 0.000000e+00 : f32
    %15 = vector.broadcast %cst_10 : f32 to vector<8x128xf32>
    %16 = arith.maximumf %14, %15 : vector<8x128xf32>
    %17 = arith.truncf %16 : vector<8x128xf32> to vector<8x128xbf16>
    %c0_11 = arith.constant 0 : index
    %c0_12 = arith.constant 0 : index
    %18 = vector.load %arg4[%c0_11, %c0_12] : memref<128x128xbf16, #tpu.memory_space<vmem>>, vector<128x128xbf16>
    %cst_13 = arith.constant dense<0.000000e+00> : vector<8x128xf32>
    %19 = tpu.matmul %17, %18, %cst_13 {dimension_numbers = #tpu.dot_dimension_numbers<[1], [0], [0], [1], [0, 0, 1, 1], [], []>} : vector<8x128xbf16>, vector<128x128xbf16>, vector<8x128xf32> -> vector<8x128xf32>
    %c2 = arith.constant 2 : index
    %c0_14 = arith.constant 0 : index
    %20 = vector.load %arg6[%c2, %c0_14] : memref<4x256xf32, #tpu.memory_space<vmem>>, vector<1x128xf32>
    %21 = vector.broadcast %20 : vector<1x128xf32> to vector<8x128xf32>
    %22 = arith.addf %19, %21 : vector<8x128xf32>
    %cst_15 = arith.constant 0.000000e+00 : f32
    %23 = vector.broadcast %cst_15 : f32 to vector<8x128xf32>
    %24 = arith.maximumf %22, %23 : vector<8x128xf32>
    %25 = arith.truncf %24 : vector<8x128xf32> to vector<8x128xbf16>
    %c0_16 = arith.constant 0 : index
    %c0_17 = arith.constant 0 : index
    %26 = vector.load %arg5[%c0_16, %c0_17] : memref<128x128xbf16, #tpu.memory_space<vmem>>, vector<128x128xbf16>
    %cst_18 = arith.constant dense<0.000000e+00> : vector<8x128xf32>
    %27 = tpu.matmul %25, %26, %cst_18 {dimension_numbers = #tpu.dot_dimension_numbers<[1], [0], [0], [1], [0, 0, 1, 1], [], []>} : vector<8x128xbf16>, vector<128x128xbf16>, vector<8x128xf32> -> vector<8x128xf32>
    %c3 = arith.constant 3 : index
    %c0_19 = arith.constant 0 : index
    %28 = vector.load %arg6[%c3, %c0_19] : memref<4x256xf32, #tpu.memory_space<vmem>>, vector<1x128xf32>
    %29 = vector.broadcast %28 : vector<1x128xf32> to vector<8x128xf32>
    %30 = arith.addf %27, %29 : vector<8x128xf32>
    %31 = arith.truncf %30 : vector<8x128xf32> to vector<8x128xbf16>
    %c0_20 = arith.constant 0 : index
    %c0_21 = arith.constant 0 : index
    %32 = vector.load %arg7[%c0_20, %c0_21] : memref<8x128xbf16, #tpu.memory_space<vmem>>, vector<8x128xbf16>
    tpu.vector_store %arg7[%c0_20, %c0_21], %31 {strides = array<i32>} : memref<8x128xbf16, #tpu.memory_space<vmem>>, vector<8x128xbf16>,
    return
  }
  func.func @transform_0(%arg0: i32) -> (i32, i32) {
    %c0_i32 = arith.constant 0 : i32
    %c0_i32_0 = arith.constant 0 : i32
    return %arg0, %c0_i32 : i32, i32
  }
  func.func @transform_1(%arg0: i32) -> (i32, i32) {
    %c0_i32 = arith.constant 0 : i32
    %c0_i32_0 = arith.constant 0 : i32
    %c0_i32_1 = arith.constant 0 : i32
    return %c0_i32, %c0_i32_0 : i32, i32
  }
  func.func @transform_2(%arg0: i32) -> (i32, i32) {
    %c0_i32 = arith.constant 0 : i32
    %c0_i32_0 = arith.constant 0 : i32
    %c0_i32_1 = arith.constant 0 : i32
    return %c0_i32, %c0_i32_0 : i32, i32
  }
  func.func @transform_3(%arg0: i32) -> (i32, i32) {
    %c0_i32 = arith.constant 0 : i32
    %c0_i32_0 = arith.constant 0 : i32
    %c0_i32_1 = arith.constant 0 : i32
    return %c0_i32, %c0_i32_0 : i32, i32
  }
  func.func @transform_4(%arg0: i32) -> (i32, i32) {
    %c0_i32 = arith.constant 0 : i32
    %c0_i32_0 = arith.constant 0 : i32
    %c0_i32_1 = arith.constant 0 : i32
    return %c0_i32, %c0_i32_0 : i32, i32
  }
  func.func @transform_5(%arg0: i32) -> (i32, i32) {
    %c0_i32 = arith.constant 0 : i32
    %c0_i32_0 = arith.constant 0 : i32
    %c0_i32_1 = arith.constant 0 : i32
    return %c0_i32, %c0_i32_0 : i32, i32
  }
  func.func @transform_6(%arg0: i32) -> (i32, i32) {
    %c0_i32 = arith.constant 0 : i32
    %c0_i32_0 = arith.constant 0 : i32
    return %arg0, %c0_i32 : i32, i32
  }
}

</mosaic_0001>

<llo_original>
// kernel: voice_classifier_forward.1
$region0: #{voice_classifier_forward.1}
  #allocation0 [shape = 'u32[]', space=smem, size = 0x4, offset = 0x4, fixed_abs, tag = 'smem constant byte address 0x4 - core index']
  #allocation1 [shape = 'u32[144,128]{1,0:T(1,128)}', space=vmem, size = 0x12000, scoped, tag = 'internal scratch']
  %s0 = inlined_call_operand.vmem [shape: f32[8,32], index: 0, kind: input, shape index: {}]
  %s1 = inlined_call_operand.vmem [shape: bf16[32,256], index: 1, kind: input, shape index: {}]
  %s2 = inlined_call_operand.vmem [shape: bf16[256,128], index: 2, kind: input, shape index: {}]
  %s3 = inlined_call_operand.vmem [shape: bf16[128,128], index: 3, kind: input, shape index: {}]
  %s4 = inlined_call_operand.vmem [shape: bf16[128,128], index: 4, kind: input, shape index: {}]
  %s5 = inlined_call_operand.vmem [shape: f32[4,256], index: 5, kind: input, shape index: {}]
  %s6 = inlined_call_operand.vmem [shape: bf16[8,128], index: 6, kind: output, shape index: {}]
  %s7 = sld [smem:[#allocation0]]
  $region34: #{voice_classifier_forward.1} parent=0
    _
  %s9 = ssub.s32 1, %s7
  %s10 = scalar_select 0, %s9, %s7
  // Predicated region
  $region2: #{voice_classifier_forward.1} parent=0 // pred_check
    _
  $region3: #{voice_classifier_forward.1} parent=0 // pred_check_branch
    %12 = sbr.rel (0) target = $region5
  $region4: #{voice_classifier_forward.1} parent=0 // pred_region
    _
  $region5: #{voice_classifier_forward.1} parent=0 // pred_fallthru
    _
  // Predicated region
  $region6: #{voice_classifier_forward.1} parent=0 // pred_check
    _
  $region7: #{voice_classifier_forward.1} parent=0 // pred_check_branch
    %14 = sbr.rel (0) target = $region9
  $region8: #{voice_classifier_forward.1} parent=0 // pred_region
    _
  $region9: #{voice_classifier_forward.1} parent=0 // pred_fallthru
    _
  // Predicated region
  $region10: #{voice_classifier_forward.1} parent=0 // pred_check
    _
  $region11: #{voice_classifier_forward.1} parent=0 // pred_check_branch
    %16 = sbr.rel (0) target = $region13
  $region12: #{voice_classifier_forward.1} parent=0 // pred_region
    _
  $region13: #{voice_classifier_forward.1} parent=0 // pred_fallthru
    _
  // Predicated region
  $region14: #{voice_classifier_forward.1} parent=0 // pred_check
    _
  $region15: #{voice_classifier_forward.1} parent=0 // pred_check_branch
    %18 = sbr.rel (0) target = $region17
  $region16: #{voice_classifier_forward.1} parent=0 // pred_region
    _
  $region17: #{voice_classifier_forward.1} parent=0 // pred_fallthru
    _
  // Predicated region
  $region18: #{voice_classifier_forward.1} parent=0 // pred_check
    _
  $region19: #{voice_classifier_forward.1} parent=0 // pred_check_branch
    %20 = sbr.rel (0) target = $region21
  $region20: #{voice_classifier_forward.1} parent=0 // pred_region
    _
  $region21: #{voice_classifier_forward.1} parent=0 // pred_fallthru
    _
  // Predicated region
  $region22: #{voice_classifier_forward.1} parent=0 // pred_check
    _
  $region23: #{voice_classifier_forward.1} parent=0 // pred_check_branch
    %22 = sbr.rel (0) target = $region25
  $region24: #{voice_classifier_forward.1} parent=0 // pred_region
    _
  $region25: #{voice_classifier_forward.1} parent=0 // pred_fallthru
    _
  %v24 = vld [vmem:[%s0] sm:$0xff]
  %v25 = vpack.c.bf16 %v24, %v24
  %v26 = vld [vmem:[%s1] sm:$0xff]
  %v27 = vld [vmem:[%s1 + $0x8] sm:$0xff]
  %v28 = vld [vmem:[%s1 + $0x10] sm:$0xff]
  %v29 = vld [vmem:[%s1 + $0x18] sm:$0xff]
  %v30 = vld [vmem:[%s5] ss:$4 sm:$0x3]
  %v32 = vlaneseq
  %v33 = vshrl.u32 %v32, 7
  %v34 = vsub.s32 0, %v33
  %v35 = vrot.slane %v30, %v34
  %v36 = vlaneseq
  %v37 = vshrl.u32 %v36, 7
  %v38 = vsub.s32 1, %v37
  %v39 = vrot.slane %v30, %v38
  %v46 = vunpack.c.l.b16 %v26
  %v47 = vunpack.c.h.b16 %v26
  %v48 = vunpack.c.l.b16 %v27
  %v49 = vunpack.c.h.b16 %v27
  %v50 = vunpack.c.l.b16 %v28
  %v51 = vunpack.c.h.b16 %v28
  %v52 = vunpack.c.l.b16 %v29
  %v53 = vunpack.c.h.b16 %v29
  %v54 = vpack.c.b16 %v48, %v46
  %v55 = vpack.c.b16 %v49, %v47
  %v56 = vpack.c.b16 %v52, %v50
  %v57 = vpack.c.b16 %v53, %v51
  %vm62 = vcmask 261120
  %v64 = vsel %vm62, %v25, 0
  %66 = vmatprep.subr.bf16.mxu0 %v55
  %67 = vmatpush1.bf16.msra.mxu0 %v54
  %68 = vmatprep.subr.bf16.mxu0 %v57
  %69 = vmatpush1.bf16.msra.mxu0 %v56
  %70 = vmatprep.subr.bf16.mxu0 0
  %71 = vmatpush1.bf16.msra.mxu0 0
  %72 = vmatprep.subr.bf16.mxu0 0
  %73 = vmatpush1.bf16.msra.mxu0 0
  %74 = vmatprep.subr.bf16.mxu0 0
  %75 = vmatpush1.bf16.msra.mxu0 0
  %76 = vmatprep.subr.bf16.mxu0 0
  %77 = vmatpush1.bf16.msra.mxu0 0
  %78 = vmatprep.subr.bf16.mxu0 0
  %79 = vmatpush1.bf16.msra.mxu0 0
  %80 = vmatprep.subr.bf16.mxu0 0
  %81 = vmatpush1.bf16.msra.mxu0 0
  %82 = vmatprep.subr.bf16.mxu0 0
  %83 = vmatpush1.bf16.msra.mxu0 0
  %84 = vmatprep.subr.bf16.mxu0 0
  %85 = vmatpush1.bf16.msra.mxu0 0
  %86 = vmatprep.subr.bf16.mxu0 0
  %87 = vmatpush1.bf16.msra.mxu0 0
  %88 = vmatprep.subr.bf16.mxu0 0
  %89 = vmatpush1.bf16.msra.mxu0 0
  %90 = vmatprep.subr.bf16.mxu0 0
  %91 = vmatpush1.bf16.msra.mxu0 0
  %92 = vmatprep.subr.bf16.mxu0 0
  %93 = vmatpush1.bf16.msra.mxu0 0
  %94 = vmatprep.subr.bf16.mxu0 0
  %95 = vmatpush1.bf16.msra.mxu0 0
  %96 = vmatprep.subr.bf16.mxu0 0
  %97 = vmatpush1.bf16.msra.mxu0 0
  %98 = vmatprep.mubr.bf16.mxu0 0
  %99 = vmatmul.mubr.bf16.gmra.mrb[0].mxu0 %v64
  %v100 = vpop.f32.mrb[0].mxu0
  %v101 = vadd.f32 %v35, %v100
  %v102 = vpop.f32.mrb[0].mxu0
  %v103 = vadd.f32 %v39, %v102
  %v104 = vpop.f32.mrb[0].mxu0
  %v105 = vpop.f32.mrb[0].mxu0
  %106 = vdwg.mxu0
  %v107 = vmax.f32 %v101, 0.0
  %v108 = vmax.f32 %v103, 0.0
  %v109 = vpack.c.bf16 %v107, %v107
  %v110 = vpack.c.bf16 %v108, %v108
  %v111 = vld [vmem:[%s2] sm:$0xf]
  %v112 = vld [vmem:[%s2 + $0x4] sm:$0xf]
  %v113 = vld [vmem:[%s2 + $0x8] sm:$0xf]
  %v114 = vld [vmem:[%s2 + $0xc] sm:$0xf]
  %v115 = vld [vmem:[%s2 + $0x10] sm:$0xf]
  %v116 = vld [vmem:[%s2 + $0x14] sm:$0xf]
  %v117 = vld [vmem:[%s2 + $0x18] sm:$0xf]
  %v118 = vld [vmem:[%s2 + $0x1c] sm:$0xf]
  %v119 = vld [vmem:[%s2 + $0x20] sm:$0xf]
  %v120 = vld [vmem:[%s2 + $0x24] sm:$0xf]
  %v121 = vld [vmem:[%s2 + $0x28] sm:$0xf]
  %v122 = vld [vmem:[%s2 + $0x2c] sm:$0xf]
  %v123 = vld [vmem:[%s2 + $0x30] sm:$0xf]
  %v124 = vld [vmem:[%s2 + $0x34] sm:$0xf]
  %v125 = vld [vmem:[%s2 + $0x38] sm:$0xf]
  %v126 = vld [vmem:[%s2 + $0x3c] sm:$0xf]
  %v127 = vld [vmem:[%s2 + $0x40] sm:$0xf]
  %v128 = vld [vmem:[%s2 + $0x44] sm:$0xf]
  %v129 = vld [vmem:[%s2 + $0x48] sm:$0xf]
  %v130 = vld [vmem:[%s2 + $0x4c] sm:$0xf]
  %v131 = vld [vmem:[%s2 + $0x50] sm:$0xf]
  %v132 = vld [vmem:[%s2 + $0x54] sm:$0xf]
  %v133 = vld [vmem:[%s2 + $0x58] sm:$0xf]
  %v134 = vld [vmem:[%s2 + $0x5c] sm:$0xf]
  %v135 = vld [vmem:[%s2 + $0x60] sm:$0xf]
  %v136 = vld [vmem:[%s2 + $0x64] sm:$0xf]
  %v137 = vld [vmem:[%s2 + $0x68] sm:$0xf]
  %v138 = vld [vmem:[%s2 + $0x6c] sm:$0xf]
  %v139 = vld [vmem:[%s2 + $0x70] sm:$0xf]
  %v140 = vld [vmem:[%s2 + $0x74] sm:$0xf]
  %v141 = vld [vmem:[%s2 + $0x78] sm:$0xf]
  %v142 = vld [vmem:[%s2 + $0x7c] sm:$0xf]
  %v143 = vld [vmem:[%s5 + $0x1] sm:$0x1]
  %v144 = vlaneseq
  %v145 = vshrl.u32 %v144, 7
  %v146 = vsub.s32 0, %v145
  %v147 = vrot.slane %v143, %v146
  %v180 = vunpack.c.l.b16 %v111
  %v181 = vunpack.c.l.b16 %v112
  %v182 = vunpack.c.l.b16 %v113
  %v183 = vunpack.c.l.b16 %v114
  %v184 = vunpack.c.l.b16 %v115
  %v185 = vunpack.c.l.b16 %v116
  %v186 = vunpack.c.l.b16 %v117
  %v187 = vunpack.c.l.b16 %v118
  %v188 = vunpack.c.l.b16 %v119
  %v189 = vunpack.c.l.b16 %v120
  %v190 = vunpack.c.l.b16 %v121
  %v191 = vunpack.c.l.b16 %v122
  %v192 = vunpack.c.l.b16 %v123
  %v193 = vunpack.c.l.b16 %v124
  %v194 = vunpack.c.l.b16 %v125
  %v195 = vunpack.c.l.b16 %v126
  %v196 = vunpack.c.l.b16 %v127
  %v197 = vunpack.c.l.b16 %v128
  %v198 = vunpack.c.l.b16 %v129
  %v199 = vunpack.c.l.b16 %v130
  %v200 = vunpack.c.l.b16 %v131
  %v201 = vunpack.c.l.b16 %v132
  %v202 = vunpack.c.l.b16 %v133
  %v203 = vunpack.c.l.b16 %v134
  %v204 = vunpack.c.l.b16 %v135
  %v205 = vunpack.c.l.b16 %v136
  %v206 = vunpack.c.l.b16 %v137
  %v207 = vunpack.c.l.b16 %v138
  %v208 = vunpack.c.l.b16 %v139
  %v209 = vunpack.c.l.b16 %v140
  %v210 = vunpack.c.l.b16 %v141
  %v211 = vunpack.c.l.b16 %v142
  %v212 = vpack.c.b16 %v181, %v180
  %v213 = vpack.c.b16 %v183, %v182
  %v214 = vpack.c.b16 %v185, %v184
  %v215 = vpack.c.b16 %v187, %v186
  %v216 = vpack.c.b16 %v189, %v188
  %v217 = vpack.c.b16 %v191, %v190
  %v218 = vpack.c.b16 %v193, %v192
  %v219 = vpack.c.b16 %v195, %v194
  %v220 = vpack.c.b16 %v197, %v196
  %v221 = vpack.c.b16 %v199, %v198
  %v222 = vpack.c.b16 %v201, %v200
  %v223 = vpack.c.b16 %v203, %v202
  %v224 = vpack.c.b16 %v205, %v204
  %v225 = vpack.c.b16 %v207, %v206
  %v226 = vpack.c.b16 %v209, %v208
  %v227 = vpack.c.b16 %v211, %v210
  %244 = vmatprep.subr.bf16.mxu0 0
  %245 = vmatpush1.bf16.msra.mxu0 %v212
  %246 = vmatprep.subr.bf16.mxu0 0
  %247 = vmatpush1.bf16.msra.mxu0 %v213
  %248 = vmatprep.subr.bf16.mxu0 0
  %249 = vmatpush1.bf16.msra.mxu0 %v214
  %250 = vmatprep.subr.bf16.mxu0 0
  %251 = vmatpush1.bf16.msra.mxu0 %v215
  %252 = vmatprep.subr.bf16.mxu0 0
  %253 = vmatpush1.bf16.msra.mxu0 %v216
  %254 = vmatprep.subr.bf16.mxu0 0
  %255 = vmatpush1.bf16.msra.mxu0 %v217
  %256 = vmatprep.subr.bf16.mxu0 0
  %257 = vmatpush1.bf16.msra.mxu0 %v218
  %258 = vmatprep.subr.bf16.mxu0 0
  %259 = vmatpush1.bf16.msra.mxu0 %v219
  %260 = vmatprep.subr.bf16.mxu0 0
  %261 = vmatpush1.bf16.msra.mxu0 %v220
  %262 = vmatprep.subr.bf16.mxu0 0
  %263 = vmatpush1.bf16.msra.mxu0 %v221
  %264 = vmatprep.subr.bf16.mxu0 0
  %265 = vmatpush1.bf16.msra.mxu0 %v222
  %266 = vmatprep.subr.bf16.mxu0 0
  %267 = vmatpush1.bf16.msra.mxu0 %v223
  %268 = vmatprep.subr.bf16.mxu0 0
  %269 = vmatpush1.bf16.msra.mxu0 %v224
  %270 = vmatprep.subr.bf16.mxu0 0
  %271 = vmatpush1.bf16.msra.mxu0 %v225
  %272 = vmatprep.subr.bf16.mxu0 0
  %273 = vmatpush1.bf16.msra.mxu0 %v226
  %274 = vmatprep.subr.bf16.mxu0 0
  %275 = vmatpush1.bf16.msra.mxu0 %v227
  %276 = vmatprep.mubr.bf16.mxu0 %v110
  %277 = vmatmul.mubr.bf16.gmra.mrb[0].mxu0 %v109
  %v278 = vpop.f32.mrb[0].mxu0
  %v279 = vadd.f32 %v147, %v278
  %v280 = vpop.f32.mrb[0].mxu0
  %v281 = vpop.f32.mrb[0].mxu0
  %v282 = vpop.f32.mrb[0].mxu0
  %283 = vdwg.mxu0
  %v284 = vmax.f32 %v279, 0.0
  %v285 = vpack.c.bf16 %v284, %v284
  %v286 = vld [vmem:[%s3] sm:$0xf]
  %v287 = vld [vmem:[%s3 + $0x4] sm:$0xf]
  %v288 = vld [vmem:[%s3 + $0x8] sm:$0xf]
  %v289 = vld [vmem:[%s3 + $0xc] sm:$0xf]
  %v290 = vld [vmem:[%s3 + $0x10] sm:$0xf]
  %v291 = vld [vmem:[%s3 + $0x14] sm:$0xf]
  %v292 = vld [vmem:[%s3 + $0x18] sm:$0xf]
  %v293 = vld [vmem:[%s3 + $0x1c] sm:$0xf]
  %v294 = vld [vmem:[%s3 + $0x20] sm:$0xf]
  %v295 = vld [vmem:[%s3 + $0x24] sm:$0xf]
  %v296 = vld [vmem:[%s3 + $0x28] sm:$0xf]
  %v297 = vld [vmem:[%s3 + $0x2c] sm:$0xf]
  %v298 = vld [vmem:[%s3 + $0x30] sm:$0xf]
  %v299 = vld [vmem:[%s3 + $0x34] sm:$0xf]
  %v300 = vld [vmem:[%s3 + $0x38] sm:$0xf]
  %v301 = vld [vmem:[%s3 + $0x3c] sm:$0xf]
  %v302 = vld [vmem:[%s5 + $0x2] sm:$0x1]
  %v303 = vlaneseq
  %v304 = vshrl.u32 %v303, 7
  %v305 = vsub.s32 0, %v304
  %v306 = vrot.slane %v302, %v305
  %v323 = vunpack.c.l.b16 %v286
  %v324 = vunpack.c.l.b16 %v287
  %v325 = vunpack.c.l.b16 %v288
  %v326 = vunpack.c.l.b16 %v289
  %v327 = vunpack.c.l.b16 %v290
  %v328 = vunpack.c.l.b16 %v291
  %v329 = vunpack.c.l.b16 %v292
  %v330 = vunpack.c.l.b16 %v293
  %v331 = vunpack.c.l.b16 %v294
  %v332 = vunpack.c.l.b16 %v295
  %v333 = vunpack.c.l.b16 %v296
  %v334 = vunpack.c.l.b16 %v297
  %v335 = vunpack.c.l.b16 %v298
  %v336 = vunpack.c.l.b16 %v299
  %v337 = vunpack.c.l.b16 %v300
  %v338 = vunpack.c.l.b16 %v301
  %v339 = vpack.c.b16 %v324, %v323
  %v340 = vpack.c.b16 %v326, %v325
  %v341 = vpack.c.b16 %v328, %v327
  %v342 = vpack.c.b16 %v330, %v329
  %v343 = vpack.c.b16 %v332, %v331
  %v344 = vpack.c.b16 %v334, %v333
  %v345 = vpack.c.b16 %v336, %v335
  %v346 = vpack.c.b16 %v338, %v337
  %355 = vmatprep.subr.bf16.mxu0 0
  %356 = vmatpush1.bf16.msra.mxu0 %v339
  %357 = vmatprep.subr.bf16.mxu0 0
  %358 = vmatpush1.bf16.msra.mxu0 %v340
  %359 = vmatprep.subr.bf16.mxu0 0
  %360 = vmatpush1.bf16.msra.mxu0 %v341
  %361 = vmatprep.subr.bf16.mxu0 0
  %362 = vmatpush1.bf16.msra.mxu0 %v342
  %363 = vmatprep.subr.bf16.mxu0 0
  %364 = vmatpush1.bf16.msra.mxu0 %v343
  %365 = vmatprep.subr.bf16.mxu0 0
  %366 = vmatpush1.bf16.msra.mxu0 %v344
  %367 = vmatprep.subr.bf16.mxu0 0
  %368 = vmatpush1.bf16.msra.mxu0 %v345
  %369 = vmatprep.subr.bf16.mxu0 0
  %370 = vmatpush1.bf16.msra.mxu0 %v346
  %371 = vmatprep.subr.bf16.mxu0 0
  %372 = vmatpush1.bf16.msra.mxu0 0
  %373 = vmatprep.subr.bf16.mxu0 0
  %374 = vmatpush1.bf16.msra.mxu0 0
  %375 = vmatprep.subr.bf16.mxu0 0
  %376 = vmatpush1.bf16.msra.mxu0 0
  %377 = vmatprep.subr.bf16.mxu0 0
  %378 = vmatpush1.bf16.msra.mxu0 0
  %379 = vmatprep.subr.bf16.mxu0 0
  %380 = vmatpush1.bf16.msra.mxu0 0
  %381 = vmatprep.subr.bf16.mxu0 0
  %382 = vmatpush1.bf16.msra.mxu0 0
  %383 = vmatprep.subr.bf16.mxu0 0
  %384 = vmatpush1.bf16.msra.mxu0 0
  %385 = vmatprep.subr.bf16.mxu0 0
  %386 = vmatpush1.bf16.msra.mxu0 0
  %387 = vmatprep.mubr.bf16.mxu0 0
  %388 = vmatmul.mubr.bf16.gmra.mrb[0].mxu0 %v285
  %v389 = vpop.f32.mrb[0].mxu0
  %v390 = vadd.f32 %v306, %v389
  %v391 = vpop.f32.mrb[0].mxu0
  %v392 = vpop.f32.mrb[0].mxu0
  %v393 = vpop.f32.mrb[0].mxu0
  %394 = vdwg.mxu0
  %v395 = vmax.f32 %v390, 0.0
  %v396 = vpack.c.bf16 %v395, %v395
  %v397 = vld [vmem:[%s4] sm:$0xf]
  %v398 = vld [vmem:[%s4 + $0x4] sm:$0xf]
  %v399 = vld [vmem:[%s4 + $0x8] sm:$0xf]
  %v400 = vld [vmem:[%s4 + $0xc] sm:$0xf]
  %v401 = vld [vmem:[%s4 + $0x10] sm:$0xf]
  %v402 = vld [vmem:[%s4 + $0x14] sm:$0xf]
  %v403 = vld [vmem:[%s4 + $0x18] sm:$0xf]
  %v404 = vld [vmem:[%s4 + $0x1c] sm:$0xf]
  %v405 = vld [vmem:[%s4 + $0x20] sm:$0xf]
  %v406 = vld [vmem:[%s4 + $0x24] sm:$0xf]
  %v407 = vld [vmem:[%s4 + $0x28] sm:$0xf]
  %v408 = vld [vmem:[%s4 + $0x2c] sm:$0xf]
  %v409 = vld [vmem:[%s4 + $0x30] sm:$0xf]
  %v410 = vld [vmem:[%s4 + $0x34] sm:$0xf]
  %v411 = vld [vmem:[%s4 + $0x38] sm:$0xf]
  %v412 = vld [vmem:[%s4 + $0x3c] sm:$0xf]
  %v413 = vld [vmem:[%s5 + $0x3] sm:$0x1]
  %v414 = vlaneseq
  %v415 = vshrl.u32 %v414, 7
  %v416 = vsub.s32 0, %v415
  %v417 = vrot.slane %v413, %v416
  %v434 = vunpack.c.l.b16 %v397
  %v435 = vunpack.c.l.b16 %v398
  %v436 = vunpack.c.l.b16 %v399
  %v437 = vunpack.c.l.b16 %v400
  %v438 = vunpack.c.l.b16 %v401
  %v439 = vunpack.c.l.b16 %v402
  %v440 = vunpack.c.l.b16 %v403
  %v441 = vunpack.c.l.b16 %v404
  %v442 = vunpack.c.l.b16 %v405
  %v443 = vunpack.c.l.b16 %v406
  %v444 = vunpack.c.l.b16 %v407
  %v445 = vunpack.c.l.b16 %v408
  %v446 = vunpack.c.l.b16 %v409
  %v447 = vunpack.c.l.b16 %v410
  %v448 = vunpack.c.l.b16 %v411
  %v449 = vunpack.c.l.b16 %v412
  %v450 = vpack.c.b16 %v435, %v434
  %v451 = vpack.c.b16 %v437, %v436
  %v452 = vpack.c.b16 %v439, %v438
  %v453 = vpack.c.b16 %v441, %v440
  %v454 = vpack.c.b16 %v443, %v442
  %v455 = vpack.c.b16 %v445, %v444
  %v456 = vpack.c.b16 %v447, %v446
  %v457 = vpack.c.b16 %v449, %v448
  %466 = vmatprep.subr.bf16.mxu0 0
  %467 = vmatpush1.bf16.msra.mxu0 %v450
  %468 = vmatprep.subr.bf16.mxu0 0
  %469 = vmatpush1.bf16.msra.mxu0 %v451
  %470 = vmatprep.subr.bf16.mxu0 0
  %471 = vmatpush1.bf16.msra.mxu0 %v452
  %472 = vmatprep.subr.bf16.mxu0 0
  %473 = vmatpush1.bf16.msra.mxu0 %v453
  %474 = vmatprep.subr.bf16.mxu0 0
  %475 = vmatpush1.bf16.msra.mxu0 %v454
  %476 = vmatprep.subr.bf16.mxu0 0
  %477 = vmatpush1.bf16.msra.mxu0 %v455
  %478 = vmatprep.subr.bf16.mxu0 0
  %479 = vmatpush1.bf16.msra.mxu0 %v456
  %480 = vmatprep.subr.bf16.mxu0 0
  %481 = vmatpush1.bf16.msra.mxu0 %v457
  %482 = vmatprep.subr.bf16.mxu0 0
  %483 = vmatpush1.bf16.msra.mxu0 0
  %484 = vmatprep.subr.bf16.mxu0 0
  %485 = vmatpush1.bf16.msra.mxu0 0
  %486 = vmatprep.subr.bf16.mxu0 0
  %487 = vmatpush1.bf16.msra.mxu0 0
  %488 = vmatprep.subr.bf16.mxu0 0
  %489 = vmatpush1.bf16.msra.mxu0 0
  %490 = vmatprep.subr.bf16.mxu0 0
  %491 = vmatpush1.bf16.msra.mxu0 0
  %492 = vmatprep.subr.bf16.mxu0 0
  %493 = vmatpush1.bf16.msra.mxu0 0
  %494 = vmatprep.subr.bf16.mxu0 0
  %495 = vmatpush1.bf16.msra.mxu0 0
  %496 = vmatprep.subr.bf16.mxu0 0
  %497 = vmatpush1.bf16.msra.mxu0 0
  %498 = vmatprep.mubr.bf16.mxu0 0
  %499 = vmatmul.mubr.bf16.gmra.mrb[0].mxu0 %v396
  %v500 = vpop.f32.mrb[0].mxu0
  %v501 = vadd.f32 %v417, %v500
  %v502 = vpop.f32.mrb[0].mxu0
  %v503 = vpop.f32.mrb[0].mxu0
  %v504 = vpop.f32.mrb[0].mxu0
  %505 = vdwg.mxu0
  %v506 = vpack.c.bf16 %v501, %v501
  %507 = vst [vmem:[%s6] sm:$0xf] %v506
  // Predicated region
  $region26: #{voice_classifier_forward.1} parent=0 // pred_check
    _
  $region27: #{voice_classifier_forward.1} parent=0 // pred_check_branch
    %509 = sbr.rel (0) target = $region29
  $region28: #{voice_classifier_forward.1} parent=0 // pred_region
    _
  $region29: #{voice_classifier_forward.1} parent=0 // pred_fallthru
    _
  // Predicated region
  $region30: #{voice_classifier_forward.1} parent=0 // pred_check
    _
  $region31: #{voice_classifier_forward.1} parent=0 // pred_check_branch
    %511 = sbr.rel (0) target = $region33
  $region32: #{voice_classifier_forward.1} parent=0 // pred_region
    _
  $region33: #{voice_classifier_forward.1} parent=0 // pred_fallthru
    _

</llo_original>
